<compile_context>
chip_gen: v7x
topology: tpu7x:2x2x1
jax: 0.10.0
libtpu: 0.0.40
codegen_flags: <defaults>
</compile_context>

<pallas_src>
import jax
import jax.numpy as jnp
from jax.experimental import pallas as pl
from jax.experimental.pallas import tpu as pltpu

LRELU_SLOPE = 0.2        # nn.LeakyReLU(0.2)
IN_EPS = 1e-5            # nn.InstanceNorm2d default eps (affine=False)
RES_SCALE = 0.1          # ResConv2dLayer: out = 0.1 * out + residual
IM2COL_MAX_CIN = 64      # wrapper-side im2col when the per-tap channel width is < half a vreg lane set

_PAD_MODE = {"zero": "constant", "reflect": "reflect", "replicate": "edge"}


def _pick_vmem_limit():
    """Generation-conditional VMEM budget: ~3/4 of physical, capped at 100 MiB."""
    try:
        cap = int(pltpu.get_tpu_info().vmem_capacity_bytes)
    except Exception:
        cap = 64 * 1024 * 1024
    return max(32 * 1024 * 1024, min(cap * 3 // 4, 100 * 1024 * 1024))


def _pick_row_block(OH, OW, width_elems, budget_bytes=2 << 20):
    """Largest divisor TR of OH whose (TR, OW, width) bf16 block fits the budget."""
    per_row = max(1, OW * width_elems * 2)
    for tr in range(OH, 0, -1):
        if OH % tr == 0 and tr * per_row <= budget_bytes:
            return tr
    return 1


# ------------------------------------------------------------------ in-kernel helpers

def _activate(x, activation):
    if activation == "lrelu":
        return jnp.where(x >= 0, x, LRELU_SLOPE * x)
    if activation == "relu":
        return jnp.maximum(x, 0.0)
    if activation == "tanh":
        return jnp.tanh(x)
    if activation == "sigmoid":
        return jax.nn.sigmoid(x)
    return x  # 'none'


def _instance_norm(acc):
    """InstanceNorm2d (affine=False) over the row axis of an (rows, C) f32 accumulator.
    One pass: var = E[x^2] - mean^2 (kept in f32)."""
    inv_m = 1.0 / acc.shape[0]
    mean = jnp.sum(acc, axis=0, keepdims=True) * inv_m
    var = jnp.maximum(jnp.sum(acc * acc, axis=0, keepdims=True) * inv_m - mean * mean, 0.0)
    return (acc - mean) * jax.lax.rsqrt(var + IN_EPS)


def _fill_border(ref, pad_mode, H, W):
    """(Re)fill only the 1-pixel halo of a (H+2, W+2, C) VMEM scratch (never the interior)."""
    HP, WP = H + 2, W + 2
    C = ref.shape[-1]
    if pad_mode == "constant":          # zero padding
        zr = jnp.zeros((1, WP, C), ref.dtype)
        zc = jnp.zeros((HP, 1, C), ref.dtype)
        ref[0:1, :, :] = zr
        ref[HP - 1:HP, :, :] = zr
        ref[:, 0:1, :] = zc
        ref[:, WP - 1:WP, :] = zc
    elif pad_mode == "edge":            # replicate
        ref[0:1, 1:1 + W, :] = ref[1:2, 1:1 + W, :]
        ref[HP - 1:HP, 1:1 + W, :] = ref[HP - 2:HP - 1, 1:1 + W, :]
        ref[:, 0:1, :] = ref[:, 1:2, :]
        ref[:, WP - 1:WP, :] = ref[:, WP - 2:WP - 1, :]
    else:                               # reflect
        ref[0:1, 1:1 + W, :] = ref[2:3, 1:1 + W, :]
        ref[HP - 1:HP, 1:1 + W, :] = ref[HP - 3:HP - 2, 1:1 + W, :]
        ref[:, 0:1, :] = ref[:, 2:3, :]
        ref[:, WP - 1:WP, :] = ref[:, WP - 3:WP - 2, :]


# ------------------------------------------------------------------ Pallas kernels

def _make_conv_stats_kernel(TR, OW, K):
    """Pass 1 of narrow-Cin convs: (TR*OW, K) x (K, CB) matmul + per-channel (sum, sumsq)."""
    M = TR * OW

    def kernel(patch_ref, w_ref, raw_ref, stats_ref):
        acc = jnp.dot(patch_ref[0].reshape(M, K), w_ref[...],
                      preferred_element_type=jnp.float32)                 # (M, CB) f32

        @pl.when(pl.program_id(2) == 0)
        def _():
            stats_ref[...] = jnp.zeros_like(stats_ref)

        s = jnp.sum(acc, axis=0, keepdims=True)                           # (1, CB)
        ss = jnp.sum(acc * acc, axis=0, keepdims=True)                    # (1, CB)
        stats_ref[0] = stats_ref[0] + jnp.concatenate([s, ss], axis=0)    # (2, CB)
        raw_ref[0] = acc.reshape(TR, OW, acc.shape[-1]).astype(raw_ref.dtype)

    return kernel


def _make_norm_act_kernel(M_total, activation):
    """Pass 2: InstanceNorm (from accumulated stats) + activation, row-tiled, elementwise."""
    inv_m = 1.0 / float(M_total)

    def kernel(raw_ref, stats_ref, out_ref):
        st = stats_ref[0]                                   # (2, CB) f32
        mean = st[0:1, :] * inv_m                           # (1, CB)
        var = jnp.maximum(st[1:2, :] * inv_m - mean * mean, 0.0)
        x = raw_ref[0].astype(jnp.float32)                  # (TR, OW, CB)
        y = (x - mean) * jax.lax.rsqrt(var + IN_EPS)
        out_ref[0] = _activate(y, activation).astype(out_ref.dtype)

    return kernel


def _make_conv_bias_act_kernel(TR, OW, K, activation):
    """Narrow-Cin conv without InstanceNorm: matmul + bias + activation (single pass)."""
    M = TR * OW

    def kernel(patch_ref, w_ref, b_ref, out_ref):
        acc = jnp.dot(patch_ref[0].reshape(M, K), w_ref[...],
                      preferred_element_type=jnp.float32)
        acc = acc + b_ref[...].astype(jnp.float32)
        acc = _activate(acc, activation)
        out_ref[0] = acc.reshape(TR, OW, acc.shape[-1]).astype(out_ref.dtype)

    return kernel


def _make_conv_full_kernel(KH, KW, OH, OW, norm, activation, use_bias):
    """Wide-Cin conv: whole-sample row-fold conv -> [InstanceNorm] -> activation."""
    M = OH * OW

    def kernel(*refs):
        if use_bias:
            xp_ref, w_ref, b_ref, out_ref = refs
        else:
            xp_ref, w_ref, out_ref = refs
            b_ref = None

        acc = None
        for kh in range(KH):
            if KW > 1:
                row = jnp.concatenate(
                    [xp_ref[0, kh:kh + OH, kw:kw + OW, :] for kw in range(KW)], axis=-1)
            else:
                row = xp_ref[0, kh:kh + OH, 0:OW, :]
            part = jnp.dot(row.reshape(M, row.shape[-1]), w_ref[kh],
                           preferred_element_type=jnp.float32)
            acc = part if acc is None else acc + part
        if b_ref is not None:
            acc = acc + b_ref[...].astype(jnp.float32)        # skipped when IN follows
        if norm == "in":
            acc = _instance_norm(acc)
        acc = _activate(acc, activation)
        out_ref[0] = acc.reshape(OH, OW, acc.shape[-1]).astype(out_ref.dtype)

    return kernel


def _make_res_chain_kernel(H, W, C, block_cfg, activation, pad_mode):
    """Fused chain of ResConv2dLayers.  The activation ping-pongs between two padded VMEM
    scratches (a_ref holds the block input / residual, h_ref the intermediate); padding is done
    in-kernel, only the 1-pixel halo is ever (re)filled."""
    M = H * W
    nb = len(block_cfg)

    def conv3x3(src_ref, w_ref):
        # row-fold: one (M, 3C) x (3C, C) matmul per kernel row
        acc = None
        for kh in range(3):
            row = jnp.concatenate([src_ref[kh:kh + H, kw:kw + W, :] for kw in range(3)], axis=-1)
            part = jnp.dot(row.reshape(M, 3 * C), w_ref[kh],
                           preferred_element_type=jnp.float32)
            acc = part if acc is None else acc + part
        return acc                                            # (M, C) f32

    def kernel(*refs):
        x_ref = refs[0]
        pos = 1
        blk_refs = []
        for cfg in block_cfg:
            w1 = refs[pos]; pos += 1
            b1 = None
            if cfg["use_bias1"]:
                b1 = refs[pos]; pos += 1
            w2 = refs[pos]; pos += 1
            b2 = refs[pos]; pos += 1
            blk_refs.append((w1, b1, w2, b2))
        out_ref = refs[pos]
        a_ref, h_ref = refs[pos + 1], refs[pos + 2]

        a_ref[1:1 + H, 1:1 + W, :] = x_ref[0]
        _fill_border(a_ref, pad_mode, H, W)
        if pad_mode == "constant":
            _fill_border(h_ref, pad_mode, H, W)               # zero halo stays valid afterwards

        for j, (cfg, (w1, b1, w2, b2)) in enumerate(zip(block_cfg, blk_refs)):
            # conv1 -> [IN] -> activation (bias dropped when IN follows; affine=False -> exact)
            h = conv3x3(a_ref, w1)
            if b1 is not None:
                h = h + b1[...].astype(jnp.float32)
            if cfg["norm"] == "in":
                h = _instance_norm(h)
            h = _activate(h, activation)
            h_ref[1:1 + H, 1:1 + W, :] = h.reshape(H, W, C).astype(h_ref.dtype)
            if pad_mode != "constant":
                _fill_border(h_ref, pad_mode, H, W)

            # conv2 (no norm / no activation) + residual in f32
            o = conv3x3(h_ref, w2) + b2[...].astype(jnp.float32)
            res = a_ref[1:1 + H, 1:1 + W, :].astype(jnp.float32).reshape(M, C)
            out = RES_SCALE * o + res
            if j == nb - 1:
                out_ref[0] = out.reshape(H, W, C).astype(out_ref.dtype)
            else:
                a_ref[1:1 + H, 1:1 + W, :] = out.reshape(H, W, C).astype(a_ref.dtype)
                if pad_mode != "constant":
                    _fill_border(a_ref, pad_mode, H, W)

    return kernel


# ------------------------------------------------------------------ layer wrappers

def conv2d_layer(x, lyr, *, pad_type, vmem_limit):
    """Conv2dLayer: pad -> conv -> [InstanceNorm] -> activation.  x: NHWC bf16."""
    N, H, W, Cin = x.shape
    k, s, p = lyr["k"], lyr["s"], lyr["p"]
    norm, act = lyr["norm"], lyr["act"]
    w, b, Cout = lyr["w"], lyr["b"], lyr["cout"]
    pad_mode = _PAD_MODE[pad_type]

    xp = jnp.pad(x, ((0, 0), (p, p), (p, p), (0, 0)), mode=pad_mode)
    HP, WP = H + 2 * p, W + 2 * p

    if s == 2:
        # Space-to-depth: stride-2 4x4 conv -> unit-stride 2x2 conv over 4x channels.
        assert k == 4 and HP % 2 == 0 and WP % 2 == 0
        xp = xp.reshape(N, HP // 2, 2, WP // 2, 2, Cin)
        xp = xp.transpose(0, 1, 3, 2, 4, 5).reshape(N, HP // 2, WP // 2, 4 * Cin)
        HP, WP, Ce, KH, KW = HP // 2, WP // 2, 4 * Cin, 2, 2
    else:
        assert s == 1
        Ce, KH, KW = Cin, k, k
    OH, OW = HP - KH + 1, WP - KW + 1

    cout_blk = 256 if (Cout > 256 and Cout % 256 == 0) else Cout
    n_cblk = Cout // cout_blk

    def cp(sem):
        return pltpu.CompilerParams(dimension_semantics=sem, vmem_limit_bytes=vmem_limit)

    if lyr["im2col"]:
        # Narrow Cin: pre-form the lane-dense im2col patch in the wrapper (no in-kernel
        # cross-lane concat), then row-tiled matmul + two-pass InstanceNorm.
        K = KH * KW * Ce
        patch = jnp.concatenate(
            [xp[:, kh:kh + OH, kw:kw + OW, :] for kh in range(KH) for kw in range(KW)], axis=-1)
        TR = _pick_row_block(OH, OW, K + cout_blk)
        n_rb = OH // TR

        if norm == "in":
            raw, stats = pl.pallas_call(
                _make_conv_stats_kernel(TR, OW, K),
                out_shape=(jax.ShapeDtypeStruct((N, OH, OW, Cout), jnp.bfloat16),
                           jax.ShapeDtypeStruct((N, 2, Cout), jnp.float32)),
                grid=(N, n_cblk, n_rb),
                in_specs=[pl.BlockSpec((1, TR, OW, K), lambda n, c, r: (n, r, 0, 0)),
                          pl.BlockSpec((K, cout_blk), lambda n, c, r: (0, c))],
                out_specs=[pl.BlockSpec((1, TR, OW, cout_blk), lambda n, c, r: (n, r, 0, c)),
                           pl.BlockSpec((1, 2, cout_blk), lambda n, c, r: (n, 0, c))],
                compiler_params=cp(("parallel", "parallel", "arbitrary")),
            )(patch, w)

            return pl.pallas_call(
                _make_norm_act_kernel(OH * OW, act),
                out_shape=jax.ShapeDtypeStruct((N, OH, OW, Cout), jnp.bfloat16),
                grid=(N, n_cblk, n_rb),
                in_specs=[pl.BlockSpec((1, TR, OW, cout_blk), lambda n, c, r: (n, r, 0, c)),
                          pl.BlockSpec((1, 2, cout_blk), lambda n, c, r: (n, 0, c))],
                out_specs=pl.BlockSpec((1, TR, OW, cout_blk), lambda n, c, r: (n, r, 0, c)),
                compiler_params=cp(("parallel", "parallel", "parallel")),
            )(raw, stats)

        return pl.pallas_call(
            _make_conv_bias_act_kernel(TR, OW, K, act),
            out_shape=jax.ShapeDtypeStruct((N, OH, OW, Cout), jnp.bfloat16),
            grid=(N, n_cblk, n_rb),
            in_specs=[pl.BlockSpec((1, TR, OW, K), lambda n, c, r: (n, r, 0, 0)),
                      pl.BlockSpec((K, cout_blk), lambda n, c, r: (0, c)),
                      pl.BlockSpec((1, cout_blk), lambda n, c, r: (0, c))],
            out_specs=pl.BlockSpec((1, TR, OW, cout_blk), lambda n, c, r: (n, r, 0, c)),
            compiler_params=cp(("parallel", "parallel", "parallel")),
        )(patch, w, b)

    # Wide Cin: whole-sample fused conv -> [IN] -> activation with row-fold matmuls.
    # TODO(synk): row-tile this path too (two-pass IN + 1-row halo) for very large maps on v7x.
    use_bias = norm != "in"   # InstanceNorm2d is affine=False -> bias is exactly cancelled
    in_specs = [pl.BlockSpec((1, HP, WP, Ce), lambda n, c: (n, 0, 0, 0)),
                pl.BlockSpec((KH, KW * Ce, cout_blk), lambda n, c: (0, 0, c))]
    args = [xp, w]
    if use_bias:
        in_specs.append(pl.BlockSpec((1, cout_blk), lambda n, c: (0, c)))
        args.append(b)

    return pl.pallas_call(
        _make_conv_full_kernel(KH, KW, OH, OW, norm, act, use_bias),
        out_shape=jax.ShapeDtypeStruct((N, OH, OW, Cout), jnp.bfloat16),
        grid=(N, n_cblk),
        in_specs=in_specs,
        out_specs=pl.BlockSpec((1, OH, OW, cout_blk), lambda n, c: (n, 0, 0, c)),
        compiler_params=cp(("parallel", "parallel")),
    )(*args)


def res_chain(x, blocks, *, pad_type, vmem_limit):
    """A group of consecutive ResConv2dLayers fused into ONE pallas_call.  x: NHWC bf16."""
    N, H, W, C = x.shape
    HP, WP = H + 2, W + 2
    pad_mode = _PAD_MODE[pad_type]

    block_cfg = [dict(norm=b["norm"], use_bias1=(b["norm"] != "in")) for b in blocks]
    kernel = _make_res_chain_kernel(H, W, C, block_cfg, blocks[0]["act"], pad_mode)

    w_spec = pl.BlockSpec((3, 3 * C, C), lambda n: (0, 0, 0))
    b_spec = pl.BlockSpec((1, C), lambda n: (0, 0))
    in_specs = [pl.BlockSpec((1, H, W, C), lambda n: (n, 0, 0, 0))]
    args = [x]
    for blk, cfg in zip(blocks, block_cfg):
        in_specs.append(w_spec); args.append(blk["conv1"]["w"])
        if cfg["use_bias1"]:
            in_specs.append(b_spec); args.append(blk["conv1"]["b"])
        in_specs.append(w_spec); args.append(blk["conv2"]["w"])
        in_specs.append(b_spec); args.append(blk["conv2"]["b"])

    return pl.pallas_call(
        kernel,
        out_shape=jax.ShapeDtypeStruct((N, H, W, C), x.dtype),
        grid=(N,),
        in_specs=in_specs,
        out_specs=pl.BlockSpec((1, H, W, C), lambda n: (n, 0, 0, 0)),
        scratch_shapes=[pltpu.VMEM((HP, WP, C), jnp.bfloat16),
                        pltpu.VMEM((HP, WP, C), jnp.bfloat16)],
        compiler_params=pltpu.CompilerParams(
            dimension_semantics=("parallel",),
            vmem_limit_bytes=vmem_limit),
    )(*args)


def _plan_res_groups(blocks, x_shape, vmem_limit):
    """Greedy grouping of res blocks so that one fused call stays within the VMEM budget."""
    N, H, W, C = x_shape
    per_block_w = 2 * (3 * 3 * C * C) * 2                      # w1 + w2 (bf16)
    fixed = (2 * (H + 2) * (W + 2) * C * 2                     # two padded scratches (bf16)
             + 4 * H * W * C * 2                               # in/out blocks, double-buffered
             + 6 * H * W * C * 4)                              # rough f32 temporaries
    budget = int(vmem_limit * 0.6) - fixed
    max_blocks = max(1, budget // max(1, 2 * per_block_w))     # weights double-buffered
    groups, i = [], 0
    while i < len(blocks):
        g = int(min(max_blocks, len(blocks) - i))
        groups.append(blocks[i:i + g])
        i += g
    return groups


# ------------------------------------------------------------------ parameters

def _spectral_norm(w_oihw, key, n_power_iterations=1, eps=1e-12):
    """PyTorch-style spectral norm on a conv weight (Cout, Cin, KH, KW): W / sigma."""
    cout = w_oihw.shape[0]
    w_mat = w_oihw.reshape(cout, -1)
    u = jax.random.normal(key, (cout,), jnp.float32)
    u = u / (jnp.linalg.norm(u) + eps)
    v = None
    for _ in range(n_power_iterations):
        v = w_mat.T @ u
        v = v / (jnp.linalg.norm(v) + eps)
        u = w_mat @ v
        u = u / (jnp.linalg.norm(u) + eps)
    sigma = u @ (w_mat @ v)
    return w_oihw / sigma


def _to_kernel_layout(w_oihw, *, stride, im2col):
    """(Cout, Cin, KH, KW) -> kernel layout, with space-to-depth folding for stride-2 4x4."""
    cout, cin, kh, kw = w_oihw.shape
    if stride == 2:
        assert kh == 4 and kw == 4
        w = w_oihw.transpose(2, 3, 1, 0)                 # (kh, kw, cin, co)
        w = w.reshape(2, 2, 2, 2, cin, cout)             # (kh2, dr, kw2, dc, cin, co)
        w = w.transpose(0, 2, 1, 3, 4, 5)                # (kh2, kw2, dr, dc, cin, co)
        kh_e, kw_e, cin_e = 2, 2, 4 * cin
        w = w.reshape(kh_e, kw_e, cin_e, cout)
    else:
        w = w_oihw.transpose(2, 3, 1, 0)                 # (kh, kw, cin, co)
        kh_e, kw_e, cin_e = kh, kw, cin
    if im2col:
        return w.reshape(kh_e * kw_e * cin_e, cout)      # K ordered (tap-major, channel-minor)
    return w.reshape(kh_e, kw_e * cin_e, cout)           # row-fold: (KW*Cin, Cout) slab per kh


def _init_conv_params(key, cin, cout, k, stride, sn, rowfold=False):
    wk, bk, uk = jax.random.split(key, 3)
    fan_in = cin * k * k
    bound = 1.0 / (fan_in ** 0.5)
    w = jax.random.uniform(wk, (cout, cin, k, k), jnp.float32, -bound, bound)
    b = jax.random.uniform(bk, (cout,), jnp.float32, -bound, bound)
    if sn:
        # TODO(synk): per-forward power iteration with persistent u; applied once at init here.
        w = _spectral_norm(w, uk)
    cin_eff = 4 * cin if stride == 2 else cin
    im2col = (not rowfold) and (cin_eff < IM2COL_MAX_CIN)
    return dict(w=_to_kernel_layout(w, stride=stride, im2col=im2col).astype(jnp.bfloat16),
                b=b.reshape(1, cout).astype(jnp.float32),
                b_vec=b, w_oihw=w, im2col=im2col, cout=cout)


def init_content_encoder(key, n_downsample, n_res, in_dim, dim,
                         activation="lrelu", norm="in", sn=True):
    assert norm in ("in", "none")
    layers = []
    counter = [0]

    def nxt():
        counter[0] += 1
        return jax.random.fold_in(key, counter[0])

    # Conv2dLayer(in_dim, dim, 7, 1, 3)
    layers.append(dict(type="conv", k=7, s=1, p=3, norm=norm, act=activation,
                       **_init_conv_params(nxt(), in_dim, dim, 7, 1, sn)))
    # Downsampling: Conv2dLayer(dim, 2*dim, 4, 2, 1)
    for _ in range(n_downsample):
        layers.append(dict(type="conv", k=4, s=2, p=1, norm=norm, act=activation,
                           **_init_conv_params(nxt(), dim, dim * 2, 4, 2, sn)))
        dim *= 2
    # Residual blocks: ResConv2dLayer(dim, 3, 1, 1); last one with norm='none'
    for j in range(n_res):
        blk_norm = norm if j < n_res - 1 else "none"
        layers.append(dict(type="res", norm=blk_norm, act=activation,
                           conv1=_init_conv_params(nxt(), dim, dim, 3, 1, sn, rowfold=True),
                           conv2=_init_conv_params(nxt(), dim, dim, 3, 1, sn, rowfold=True)))
    return layers, dim


# ------------------------------------------------------------------ forward

def content_encoder_forward(x_nchw, layers, pad_type):
    vmem_limit = _pick_vmem_limit()
    x = jnp.transpose(x_nchw, (0, 2, 3, 1)).astype(jnp.bfloat16)       # NCHW f32 -> NHWC bf16
    i = 0
    while i < len(layers):
        if layers[i]["type"] == "conv":
            x = conv2d_layer(x, layers[i], pad_type=pad_type, vmem_limit=vmem_limit)
            i += 1
        else:
            j = i
            while j < len(layers) and layers[j]["type"] == "res":
                j += 1
            for grp in _plan_res_groups(layers[i:j], x.shape, vmem_limit):
                x = res_chain(x, grp, pad_type=pad_type, vmem_limit=vmem_limit)
            i = j
    return jnp.transpose(x, (0, 3, 1, 2)).astype(jnp.float32)          # NHWC -> NCHW f32


# ------------------------------------------------------------------ pure-JAX reference (self-check)

def _round_bf16(x):
    return x.astype(jnp.bfloat16).astype(jnp.float32)


def _ref_conv(x, w_oihw, b, stride, pad, mode):
    xp = jnp.pad(x, ((0, 0), (pad, pad), (pad, pad), (0, 0)), mode=mode)
    w = jnp.transpose(w_oihw, (2, 3, 1, 0))                  # OIHW -> HWIO
    y = jax.lax.conv_general_dilated(
        xp, w, (stride, stride), "VALID",
        dimension_numbers=("NHWC", "HWIO", "NHWC"),
        precision=jax.lax.Precision.HIGHEST)
    if b is not None:
        y = y + b
    return y


def _ref_in_stats(y):
    m = y.shape[1] * y.shape[2]
    mean = jnp.sum(y, axis=(1, 2), keepdims=True) / m
    var = jnp.maximum(jnp.sum(y * y, axis=(1, 2), keepdims=True) / m - mean * mean, 0.0)
    return mean, var


def reference_forward(x_nchw, layers, pad_type):
    """Mirrors the kernels' bf16 rounding points so the comparison tolerance can stay tight."""
    mode = _PAD_MODE[pad_type]
    x = _round_bf16(jnp.transpose(x_nchw, (0, 2, 3, 1)).astype(jnp.float32))
    for lyr in layers:
        if lyr["type"] == "conv":
            w = _round_bf16(lyr["w_oihw"])
            use_bias = lyr["norm"] != "in"
            y = _ref_conv(x, w, lyr["b_vec"] if use_bias else None, lyr["s"], lyr["p"], mode)
            if lyr["norm"] == "in":
                mean, var = _ref_in_stats(y)
                if lyr["im2col"]:            # two-pass kernel stores the raw conv in bf16
                    y = _round_bf16(y)
                y = (y - mean) * jax.lax.rsqrt(var + IN_EPS)
            x = _round_bf16(_activate(y, lyr["act"]))
        else:
            w1 = _round_bf16(lyr["conv1"]["w_oihw"])
            w2 = _round_bf16(lyr["conv2"]["w_oihw"])
            use_b1 = lyr["norm"] != "in"
            h = _ref_conv(x, w1, lyr["conv1"]["b_vec"] if use_b1 else None, 1, 1, mode)
            if lyr["norm"] == "in":
                mean, var = _ref_in_stats(h)
                h = (h - mean) * jax.lax.rsqrt(var + IN_EPS)
            h = _round_bf16(_activate(h, lyr["act"]))
            o = _ref_conv(h, w2, lyr["conv2"]["b_vec"], 1, 1, mode)
            x = _round_bf16(RES_SCALE * o + x)
    return jnp.transpose(x, (0, 3, 1, 2))


# ------------------------------------------------------------------ main

if __name__ == "__main__":
    n_downsample, n_res = 2, 2
    in_dim, dim = 3, 8
    N, H, W = 2, 16, 16
    pad_type = "zero"

    layers, content_dim = init_content_encoder(
        jax.random.PRNGKey(0), n_downsample, n_res, in_dim, dim,
        activation="lrelu", norm="in", sn=True)

    x = jax.random.normal(jax.random.PRNGKey(0), (N, in_dim, H, W), jnp.float32)

    y = jax.block_until_ready(content_encoder_forward(x, layers, pad_type))

    exp = (N, content_dim, H // (2 ** n_downsample), W // (2 ** n_downsample))
    assert y.shape == exp, (y.shape, exp)
    assert bool(jnp.all(jnp.isfinite(y)))

    # Numerical self-check against a pure-JAX reference that mirrors the bf16 rounding points.
    y_ref = reference_forward(x, layers, pad_type)
    err = float(jnp.max(jnp.abs(y - y_ref)))
    assert err < 3e-2, f"max abs diff vs reference: {err}"

    print("KERNEL_OK")
</pallas_src>

<mosaic_0001>
module attributes {stable_mosaic.version = 11 : i64} {
  func.func @kernel(%arg0: i32, %arg1: i32, %arg2: i32, %arg3: memref<1x16x16x147xbf16, #tpu.memory_space<vmem>>, %arg4: memref<147x8xbf16, #tpu.memory_space<vmem>>, %arg5: memref<1x16x16x8xbf16, #tpu.memory_space<vmem>>, %arg6: memref<1x2x8xf32, #tpu.memory_space<vmem>>) attributes {dimension_semantics = [#tpu.dimension_semantics<parallel>, #tpu.dimension_semantics<parallel>, #tpu.dimension_semantics<arbitrary>], iteration_bounds = array<i64: 2, 1, 1>, scalar_prefetch = 0 : i64, scratch_operands = 0 : i64, tpu.core_type = #tpu.core_type<tc>, window_params = [{transform_indices = @transform_0, window_bounds = array<i64: 1, 16, 16, 147>}, {transform_indices = @transform_1, window_bounds = array<i64: 147, 8>}, {transform_indices = @transform_2, window_bounds = array<i64: 1, 16, 16, 8>}, {transform_indices = @transform_3, window_bounds = array<i64: 1, 2, 8>}]} {
    %c0 = arith.constant 0 : index
    %c0_0 = arith.constant 0 : index
    %c0_1 = arith.constant 0 : index
    %c0_2 = arith.constant 0 : index
    %0 = vector.load %arg3[%c0, %c0_0, %c0_1, %c0_2] : memref<1x16x16x147xbf16, #tpu.memory_space<vmem>>, vector<1x16x16x147xbf16>
    %1 = vector.shape_cast %0 : vector<1x16x16x147xbf16> to vector<16x16x147xbf16>
    %2 = vector.shape_cast %1 : vector<16x16x147xbf16> to vector<256x147xbf16>
    %c0_3 = arith.constant 0 : index
    %c0_4 = arith.constant 0 : index
    %3 = vector.load %arg4[%c0_3, %c0_4] : memref<147x8xbf16, #tpu.memory_space<vmem>>, vector<147x8xbf16>
    %cst = arith.constant dense<0.000000e+00> : vector<256x8xf32>
    %4 = tpu.matmul %2, %3, %cst {dimension_numbers = #tpu.dot_dimension_numbers<[1], [0], [0], [1], [0, 0, 1, 1], [], []>} : vector<256x147xbf16>, vector<147x8xbf16>, vector<256x8xf32> -> vector<256x8xf32>
    %c0_i32 = arith.constant 0 : i32
    %5 = arith.cmpi eq, %arg2, %c0_i32 : i32
    %6 = arith.extui %5 : i1 to i32
    %c0_i32_5 = arith.constant 0 : i32
    %7 = arith.cmpi ne, %6, %c0_i32_5 : i32
    scf.if %7 {
      %cst_18 = arith.constant 0.000000e+00 : f32
      %25 = vector.broadcast %cst_18 : f32 to vector<1x2x8xf32>
      %c0_19 = arith.constant 0 : index
      %c0_20 = arith.constant 0 : index
      %c0_21 = arith.constant 0 : index
      %26 = vector.load %arg6[%c0_19, %c0_20, %c0_21] : memref<1x2x8xf32, #tpu.memory_space<vmem>>, vector<1x2x8xf32>
      tpu.vector_store %arg6[%c0_19, %c0_20, %c0_21], %25 {strides = array<i32>} : memref<1x2x8xf32, #tpu.memory_space<vmem>>, vector<1x2x8xf32>,
    } else {
    }
    %cst_6 = arith.constant dense<0.000000e+00> : vector<8xf32>
    %8 = vector.multi_reduction <add>, %4, %cst_6 [0] : vector<256x8xf32> to vector<8xf32>
    %9 = vector.shape_cast %8 : vector<8xf32> to vector<1x8xf32>
    %10 = arith.mulf %4, %4 : vector<256x8xf32>
    %cst_7 = arith.constant dense<0.000000e+00> : vector<8xf32>
    %11 = vector.multi_reduction <add>, %10, %cst_7 [0] : vector<256x8xf32> to vector<8xf32>
    %12 = vector.shape_cast %11 : vector<8xf32> to vector<1x8xf32>
    %c0_8 = arith.constant 0 : index
    %c0_9 = arith.constant 0 : index
    %c0_10 = arith.constant 0 : index
    %13 = vector.load %arg6[%c0_8, %c0_9, %c0_10] : memref<1x2x8xf32, #tpu.memory_space<vmem>>, vector<1x2x8xf32>
    %14 = vector.shape_cast %13 : vector<1x2x8xf32> to vector<2x8xf32>
    %15 = tpu.concatenate %9, %12 in 0 : vector<1x8xf32>, vector<1x8xf32> -> vector<2x8xf32>
    %16 = arith.addf %14, %15 : vector<2x8xf32>
    %c0_11 = arith.constant 0 : index
    %c0_12 = arith.constant 0 : index
    %c0_13 = arith.constant 0 : index
    %17 = vector.load %arg6[%c0_11, %c0_12, %c0_13] : memref<1x2x8xf32, #tpu.memory_space<vmem>>, vector<1x2x8xf32>
    %18 = vector.shape_cast %17 : vector<1x2x8xf32> to vector<2x8xf32>
    %19 = vector.shape_cast %16 : vector<2x8xf32> to vector<1x2x8xf32>
    tpu.vector_store %arg6[%c0_11, %c0_12, %c0_13], %19 {strides = array<i32>} : memref<1x2x8xf32, #tpu.memory_space<vmem>>, vector<1x2x8xf32>,
    %20 = vector.shape_cast %4 : vector<256x8xf32> to vector<16x16x8xf32>
    %21 = arith.truncf %20 : vector<16x16x8xf32> to vector<16x16x8xbf16>
    %c0_14 = arith.constant 0 : index
    %c0_15 = arith.constant 0 : index
    %c0_16 = arith.constant 0 : index
    %c0_17 = arith.constant 0 : index
    %22 = vector.load %arg5[%c0_14, %c0_15, %c0_16, %c0_17] : memref<1x16x16x8xbf16, #tpu.memory_space<vmem>>, vector<1x16x16x8xbf16>
    %23 = vector.shape_cast %22 : vector<1x16x16x8xbf16> to vector<16x16x8xbf16>
    %24 = vector.shape_cast %21 : vector<16x16x8xbf16> to vector<1x16x16x8xbf16>
    tpu.vector_store %arg5[%c0_14, %c0_15, %c0_16, %c0_17], %24 {strides = array<i32>} : memref<1x16x16x8xbf16, #tpu.memory_space<vmem>>, vector<1x16x16x8xbf16>,
    return
  }
  func.func @transform_0(%arg0: i32, %arg1: i32, %arg2: i32) -> (i32, i32, i32, i32) {
    %c0_i32 = arith.constant 0 : i32
    %c0_i32_0 = arith.constant 0 : i32
    %c0_i32_1 = arith.constant 0 : i32
    return %arg0, %arg2, %c0_i32, %c0_i32_0 : i32, i32, i32, i32
  }
  func.func @transform_1(%arg0: i32, %arg1: i32, %arg2: i32) -> (i32, i32) {
    %c0_i32 = arith.constant 0 : i32
    %c0_i32_0 = arith.constant 0 : i32
    return %c0_i32, %arg1 : i32, i32
  }
  func.func @transform_2(%arg0: i32, %arg1: i32, %arg2: i32) -> (i32, i32, i32, i32) {
    %c0_i32 = arith.constant 0 : i32
    %c0_i32_0 = arith.constant 0 : i32
    return %arg0, %arg2, %c0_i32, %arg1 : i32, i32, i32, i32
  }
  func.func @transform_3(%arg0: i32, %arg1: i32, %arg2: i32) -> (i32, i32, i32) {
    %c0_i32 = arith.constant 0 : i32
    %c0_i32_0 = arith.constant 0 : i32
    return %arg0, %c0_i32, %arg1 : i32, i32, i32
  }
}

</mosaic_0001>

<llo_original>
// kernel: tpu_custom_call.1
$region0: #{tpu_custom_call.1}
  #allocation0 [shape = 'u32[]', space=smem, size = 0x4, offset = 0x4, fixed_abs, tag = 'smem constant byte address 0x4 - core index']
  #allocation1 [shape = 'u32[144,128]{1,0:T(1,128)}', space=vmem, size = 0x12000, scoped, tag = 'internal scratch']
  %s0 = inlined_call_operand.hbm [shape: bf16[2,16,16,147], index: 0, kind: input, shape index: {}]
  %s1 = inlined_call_operand.vmem [shape: bf16[147,8], index: 1, kind: input, shape index: {}]
  %s2 = inlined_call_operand.vmem [shape: bf16[2,16,16,8], index: 2, kind: output, shape index: {0}]
  %s3 = inlined_call_operand.hbm [shape: f32[2,2,8], index: 3, kind: output, shape index: {1}]
  %4 = xla_tuple %s2, %s3
  %s5 = sld [smem:[#allocation0]]
  $region57: #{tpu_custom_call.1} parent=0
    _
  %s7 = ssub.s32 1, %s5
  %s8 = scalar_select 0, %s7, %s5
  $region1: #{tpu_custom_call.1} parent=0
    #allocation2 [shape = 'u8[262144]{0}', space=vmem, size = 0x40000, scoped, tag = 'input window, operand 0']
    #allocation3 [shape = 's32[2]{0}', space=sflag, size = 0x8, scoped, tag = 'scoped memory for tpu_custom_call.1']
    #allocation4 [shape = 's32[2]{0}', space=sflag, size = 0x8, scoped, tag = 'scoped memory for tpu_custom_call.1']
    #allocation5 [shape = 'u8[2048]{0}', space=vmem, size = 0x800, scoped, tag = 'output window, operand 1']
    %9 = vsyncpa [#allocation3], 0
    %s10 = scalar_lea.sflag [#allocation3], 1
    %11 = vsyncpa %s10, 0
    %12 = vsyncpa [#allocation4], 0
    %s13 = scalar_lea.sflag [#allocation4], 1
    %14 = vsyncpa %s13, 0
    loop: start=0, step=1, limit=4
    $region2: #{tpu_custom_call.1} parent=1 // loop_pre_header
      _
    $region3: #{tpu_custom_call.1} parent=1 // loop_header
      %s16 = sphi 0, %s20
      %p17 = scmp.ge.s32.totalorder %s16, 4
      %s23 = sphi 0, %s42
      %s24 = sphi 0, %s38
      %s25 = sphi 0, %s34
      %s26 = sphi 0, %s23
      %s27 = sphi 0, %s24
      %s28 = sphi 0, %s25
      %s29 = sphi 0, %s26
      %s30 = sphi 0, %s27
      %s31 = sphi 0, %s28
      %s47 = sphi 0, %s49
      %s50 = sphi 0, %s47
      %s51 = sphi 0, %s50
      %s67 = sphi 0, %s51
      %s73 = sphi 0, %s75
      %s76 = sphi 0, %s73
      %s77 = sphi 0, %s76
      %s93 = sphi 0, %s77
      %s103 = sphi 0, %s105
      %s106 = sphi 0, %s103
      %s107 = sphi 0, %s106
      %s123 = sphi 0, %s107
      %s131 = sphi 0, %s133
      %s134 = sphi 0, %s131
      %s135 = sphi 0, %s134
      %s151 = sphi 0, %s135
    $region4: #{tpu_custom_call.1} parent=1 // loop_header_branch
      %19 = sbr.rel (%p17) target = $region8
    $region5: #{tpu_custom_call.1} parent=1 // loop_body
      %s21 = ssub.s32 %s16, 1
      %s22 = ssub.s32 %s16, 2
      %s32 = sadd.s32 1, %s25
      %p33 = scmp.ge.s32.totalorder %s32, 1
      %s34 = scalar_select %p33, 0, %s32
      %s35 = sadd.s32 1, %s24
      %s36 = scalar_select %p33, %s35, %s24
      %p37 = scmp.ge.s32.totalorder %s36, 1
      %s38 = scalar_select %p37, 0, %s36
      %s39 = sadd.s32 1, %s23
      %s40 = scalar_select %p37, %s39, %s23
      %p41 = scmp.ge.s32.totalorder %s40, 2
      %s42 = scalar_select %p41, 0, %s40
      %s43 = ssub.s32 %s23, %s42
      %s44 = ssub.s32 %s25, %s34
      %s45 = sor.u32 %s43, %s44
      %p46 = scmp.eq.s32.totalorder %s45, 0
      %s48 = sadd.s32 %s47, 1
      %s49 = scalar_select %p46, %s47, %s48
      %p52 = pneg %p46
      %p53 = scmp.eq.s32.totalorder %s16, 1
      %p54 = por %p52, %p53
      %p55 = scmp.ne.s32.totalorder %s47, %s50
      %p56 = scmp.eq.s32.totalorder %s16, 0
      %p57 = por %p55, %p56
      %p58 = scmp.ne.s32.totalorder %s47, %s50
      %p59 = scmp.eq.s32.totalorder %s21, 1
      %p60 = por %p58, %p59
      %p61 = scmp.ne.s32.totalorder %s50, %s51
      %p62 = scmp.eq.s32.totalorder %s21, 0
      %p63 = por %p61, %p62
      %p64 = scmp.ne.s32.totalorder %s50, %s51
      %p65 = scmp.eq.s32.totalorder %s22, 1
      %p66 = por %p64, %p65
      %p68 = scmp.ne.s32.totalorder %s51, %s67
      %p69 = scmp.eq.s32.totalorder %s22, 0
      %p70 = por %p68, %p69
      %s71 = ssub.s32 %s24, %s38
      %p72 = scmp.eq.s32.totalorder %s71, 0
      %s74 = sadd.s32 %s73, 1
      %s75 = scalar_select %p72, %s73, %s74
      %p78 = pneg %p72
      %p79 = scmp.eq.s32.totalorder %s16, 1
      %p80 = por %p78, %p79
      %p81 = scmp.ne.s32.totalorder %s73, %s76
      %p82 = scmp.eq.s32.totalorder %s16, 0
      %p83 = por %p81, %p82
      %p84 = scmp.ne.s32.totalorder %s73, %s76
      %p85 = scmp.eq.s32.totalorder %s21, 1
      %p86 = por %p84, %p85
      %p87 = scmp.ne.s32.totalorder %s76, %s77
      %p88 = scmp.eq.s32.totalorder %s21, 0
      %p89 = por %p87, %p88
      %p90 = scmp.ne.s32.totalorder %s76, %s77
      %p91 = scmp.eq.s32.totalorder %s22, 1
      %p92 = por %p90, %p91
      %p94 = scmp.ne.s32.totalorder %s77, %s93
      %p95 = scmp.eq.s32.totalorder %s22, 0
      %p96 = por %p94, %p95
      %s97 = ssub.s32 %s23, %s42
      %s98 = ssub.s32 %s25, %s34
      %s99 = sor.u32 %s97, %s98
      %s100 = ssub.s32 %s24, %s38
      %s101 = sor.u32 %s99, %s100
      %p102 = scmp.eq.s32.totalorder %s101, 0
      %s104 = sadd.s32 %s103, 1
      %s105 = scalar_select %p102, %s103, %s104
      %p108 = pneg %p102
      %p109 = scmp.eq.s32.totalorder %s16, 1
      %p110 = por %p108, %p109
      %p111 = scmp.ne.s32.totalorder %s103, %s106
      %p112 = scmp.eq.s32.totalorder %s16, 0
      %p113 = por %p111, %p112
      %p114 = scmp.ne.s32.totalorder %s103, %s106
      %p115 = scmp.eq.s32.totalorder %s21, 1
      %p116 = por %p114, %p115
      %p117 = scmp.ne.s32.totalorder %s106, %s107
      %p118 = scmp.eq.s32.totalorder %s21, 0
      %p119 = por %p117, %p118
      %p120 = scmp.ne.s32.totalorder %s106, %s107
      %p121 = scmp.eq.s32.totalorder %s22, 1
      %p122 = por %p120, %p121
      %p124 = scmp.ne.s32.totalorder %s107, %s123
      %p125 = scmp.eq.s32.totalorder %s22, 0
      %p126 = por %p124, %p125
      %s127 = ssub.s32 %s23, %s42
      %s128 = ssub.s32 %s24, %s38
      %s129 = sor.u32 %s127, %s128
      %p130 = scmp.eq.s32.totalorder %s129, 0
      %s132 = sadd.s32 %s131, 1
      %s133 = scalar_select %p130, %s131, %s132
      %p136 = pneg %p130
      %p137 = scmp.eq.s32.totalorder %s16, 1
      %p138 = por %p136, %p137
      %p139 = scmp.ne.s32.totalorder %s131, %s134
      %p140 = scmp.eq.s32.totalorder %s16, 0
      %p141 = por %p139, %p140
      %p142 = scmp.ne.s32.totalorder %s131, %s134
      %p143 = scmp.eq.s32.totalorder %s21, 1
      %p144 = por %p142, %p143
      %p145 = scmp.ne.s32.totalorder %s134, %s135
      %p146 = scmp.eq.s32.totalorder %s21, 0
      %p147 = por %p145, %p146
      %p148 = scmp.ne.s32.totalorder %s134, %s135
      %p149 = scmp.eq.s32.totalorder %s22, 1
      %p150 = por %p148, %p149
      %p152 = scmp.ne.s32.totalorder %s135, %s151
      %p153 = scmp.eq.s32.totalorder %s22, 0
      %p154 = por %p152, %p153
      %p155 = scmp.le.s32.totalorder 1, %s16
      %p156 = scmp.lt.s32.totalorder %s16, 3
      %p157 = pnand %p155, %p156
      %p158 = pneg %p157
      // Predicated region
      $region9: #{tpu_custom_call.1} parent=5 // pred_check
        _
      $region10: #{tpu_custom_call.1} parent=5 // pred_check_branch
        %160 = sbr.rel (%p157) target = $region12
      $region11: #{tpu_custom_call.1} parent=5 // pred_region
        %s161 = ssub.s32 %s16, 1
        // Predicated region
        $region13: #{tpu_custom_call.1} parent=11 // pred_check
          %p162 = pneg %p89
        $region14: #{tpu_custom_call.1} parent=11 // pred_check_branch
          %164 = sbr.rel (%p162) target = $region16
        $region15: #{tpu_custom_call.1} parent=11 // pred_region
          %p165 = scmp.lt.s32.totalorder %s27, 0
          %s166 = scalar_select %p165, %s27, 0
          %s167 = smul.addr %s166, 4
          %s168 = scalar_lea.vmem %s1, %s167
        $region16: #{tpu_custom_call.1} parent=11 // pred_fallthru
          _
      $region12: #{tpu_custom_call.1} parent=5 // pred_fallthru
        _
      %p169 = scmp.lt.s32.totalorder %s16, 2
      // Predicated region
      $region17: #{tpu_custom_call.1} parent=5 // pred_check
        %p170 = pneg %p169
      $region18: #{tpu_custom_call.1} parent=5 // pred_check_branch
        %172 = sbr.rel (%p170) target = $region20
      $region19: #{tpu_custom_call.1} parent=5 // pred_region
        // Predicated region
        $region21: #{tpu_custom_call.1} parent=19 // pred_check
          %p173 = pneg %p57
        $region22: #{tpu_custom_call.1} parent=19 // pred_check_branch
          %175 = sbr.rel (%p173) target = $region24
        $region23: #{tpu_custom_call.1} parent=19 // pred_region
          %s176 = sand.u32 %s47, 1
          %s177 = scalar_lea.sflag [#allocation3], %s176
          %s178 = sand.u32 %s47, 1
          %s179 = smul.addr %s178, 256
          %s180 = scalar_lea.vmem [#allocation2], %s179
          %s181 = smul.u32 16, %s25
          %s183 = ssub.s32 4096, 4096
          %184 = vsyncadd %s177, %s183
          %s185 = smul.addr %s181, 4
          %s186 = smul.addr %s23, 64
          %s187 = sadd.s32 %s185, %s186
          %s188 = smul.addr %s187, 64
          %s189 = scalar_lea.hbm %s0, %s188
          %s190 = sshll.u32 %s180, 4
          %s191 = int_to_ptr.vmem [resolvable:$true] %s190
          %196 = dma.hbm_to_vmem [thread:$0]  %s189, 4096, %s191, %s177, 128, 128, 8
        $region24: #{tpu_custom_call.1} parent=19 // pred_fallthru
          _
      $region20: #{tpu_custom_call.1} parent=5 // pred_fallthru
        _
      %p197 = scmp.le.s32.totalorder 1, %s16
      %p198 = scmp.lt.s32.totalorder %s16, 3
      %p199 = pnand %p197, %p198
      %p200 = pneg %p199
      // Predicated region
      $region25: #{tpu_custom_call.1} parent=5 // pred_check
        _
      $region26: #{tpu_custom_call.1} parent=5 // pred_check_branch
        %202 = sbr.rel (%p199) target = $region28
      $region27: #{tpu_custom_call.1} parent=5 // pred_region
        %s203 = ssub.s32 %s16, 1
        %s204 = sand.u32 %s50, 1
        %s205 = scalar_lea.sflag [#allocation3], %s204
        %s206 = sand.u32 %s50, 1
        %s207 = smul.addr %s206, 256
        %s208 = scalar_lea.vmem [#allocation2], %s207
        // Predicated region
        $region29: #{tpu_custom_call.1} parent=27 // pred_check
          %p209 = pneg %p63
        $region30: #{tpu_custom_call.1} parent=27 // pred_check_branch
          %211 = sbr.rel (%p209) target = $region32
        $region31: #{tpu_custom_call.1} parent=27 // pred_region
          %212 = dma.done %s205, 4096
        $region32: #{tpu_custom_call.1} parent=27 // pred_fallthru
          _
        %s213 = sand.u32 %s50, 1
        %s214 = scalar_lea.sflag [#allocation3], %s213
        %s215 = sand.u32 %s50, 1
        %s216 = smul.addr %s215, 256
        %s217 = scalar_lea.vmem [#allocation2], %s216
        %p218 = pneg %p63
        %p219 = pneg %p60
        %p220 = scmp.lt.s32.totalorder %s27, 0
        %s221 = scalar_select %p220, %s27, 0
        %s222 = smul.addr %s221, 4
        %s223 = scalar_lea.vmem %s1, %s222
        %p224 = pneg %p89
        %p225 = pneg %p86
        %p226 = pneg %p119
        %p227 = pneg %p116
        %s228 = smul.u32 16, %s28
        %p229 = scmp.lt.s32.totalorder %s26, 1
        %s230 = scalar_select %p229, %s26, 1
        %p231 = scmp.lt.s32.totalorder %s228, 15
        %s232 = scalar_select %p231, %s228, 15
        %p233 = scmp.lt.s32.totalorder %s27, 0
        %s234 = scalar_select %p233, %s27, 0
        %s235 = smul.addr %s232, 2
        %s236 = sadd.s32 %s234, %s235
        %s237 = smul.addr %s230, 32
        %s238 = sadd.s32 %s236, %s237
        %s239 = smul.addr %s238, 4
        %s240 = scalar_lea.vmem %s2, %s239
        %p241 = pneg %p147
        %p242 = pneg %p144
        %s243 = sand.u32 %s134, 1
        %s244 = scalar_lea.sflag [#allocation4], %s243
        %s245 = sand.u32 %s134, 1
        %s246 = smul.addr %s245, 2
        %s247 = scalar_lea.vmem [#allocation5], %s246
        %s248 = smul.u32 16, %s28
        %p249 = scmp.lt.s32.totalorder %s27, 0
        %s250 = scalar_select %p249, %s27, 0
        %s251 = smul.addr %s250, 4
        %s252 = scalar_lea.vmem %s1, %s251
        %s253 = smul.u32 16, %s28
        %p254 = scmp.lt.s32.totalorder %s26, 1
        %s255 = scalar_select %p254, %s26, 1
        %p256 = scmp.lt.s32.totalorder %s253, 15
        %s257 = scalar_select %p256, %s253, 15
        %p258 = scmp.lt.s32.totalorder %s27, 0
        %s259 = scalar_select %p258, %s27, 0
        %s260 = smul.addr %s257, 2
        %s261 = sadd.s32 %s259, %s260
        %s262 = smul.addr %s255, 32
        %s263 = sadd.s32 %s261, %s262
        %s264 = smul.addr %s263, 4
        %s265 = scalar_lea.vmem %s2, %s264
        %s266 = smul.u32 16, %s28
        %v268 = vld [vmem:[%s208] sm:$0xff]
        %v269 = vld [vmem:[%s208 + $0x8] sm:$0xff]
        %v270 = vld [vmem:[%s208 + $0x10] sm:$0xff]
        %v271 = vld [vmem:[%s208 + $0x18] sm:$0xff]
        %v272 = vld [vmem:[%s208 + $0x20] sm:$0xff]
        %v273 = vld [vmem:[%s208 + $0x28] sm:$0xff]
        %v274 = vld [vmem:[%s208 + $0x30] sm:$0xff]
        %v275 = vld [vmem:[%s208 + $0x38] sm:$0xff]
        %v276 = vld [vmem:[%s208 + $0x40] sm:$0xff]
        %v277 = vld [vmem:[%s208 + $0x48] sm:$0xff]
        %v278 = vld [vmem:[%s208 + $0x50] sm:$0xff]
        %v279 = vld [vmem:[%s208 + $0x58] sm:$0xff]
        %v280 = vld [vmem:[%s208 + $0x60] sm:$0xff]
        %v281 = vld [vmem:[%s208 + $0x68] sm:$0xff]
        %v282 = vld [vmem:[%s208 + $0x70] sm:$0xff]
        %v283 = vld [vmem:[%s208 + $0x78] sm:$0xff]
        %v284 = vld [vmem:[%s208 + $0x80] sm:$0xff]
        %v285 = vld [vmem:[%s208 + $0x88] sm:$0xff]
        %v286 = vld [vmem:[%s208 + $0x90] sm:$0xff]
        %v287 = vld [vmem:[%s208 + $0x98] sm:$0xff]
        %v288 = vld [vmem:[%s208 + $0xa0] sm:$0xff]
        %v289 = vld [vmem:[%s208 + $0xa8] sm:$0xff]
        %v290 = vld [vmem:[%s208 + $0xb0] sm:$0xff]
        %v291 = vld [vmem:[%s208 + $0xb8] sm:$0xff]
        %v292 = vld [vmem:[%s208 + $0xc0] sm:$0xff]
        %v293 = vld [vmem:[%s208 + $0xc8] sm:$0xff]
        %v294 = vld [vmem:[%s208 + $0xd0] sm:$0xff]
        %v295 = vld [vmem:[%s208 + $0xd8] sm:$0xff]
        %v296 = vld [vmem:[%s208 + $0xe0] sm:$0xff]
        %v297 = vld [vmem:[%s208 + $0xe8] sm:$0xff]
        %v298 = vld [vmem:[%s208 + $0xf0] sm:$0xff]
        %v299 = vld [vmem:[%s208 + $0xf8] sm:$0xff]
        %v300 = vld [vmem:[%s252] sm:$0xf]
        %v301 = vld [vmem:[%s252 + $0x4] sm:$0xf]
        %v302 = vld [vmem:[%s252 + $0x8] sm:$0xf]
        %v303 = vld [vmem:[%s252 + $0xc] sm:$0xf]
        %v304 = vld [vmem:[%s252 + $0x10] sm:$0xf]
        %v305 = vld [vmem:[%s252 + $0x14] sm:$0xf]
        %v306 = vld [vmem:[%s252 + $0x18] sm:$0xf]
        %v307 = vld [vmem:[%s252 + $0x1c] sm:$0xf]
        %v308 = vld [vmem:[%s252 + $0x20] sm:$0xf]
        %v309 = vld [vmem:[%s252 + $0x24] sm:$0xf]
        %v310 = vld [vmem:[%s252 + $0x28] sm:$0xf]
        %v311 = vld [vmem:[%s252 + $0x2c] sm:$0xf]
        %v312 = vld [vmem:[%s252 + $0x30] sm:$0xf]
        %v313 = vld [vmem:[%s252 + $0x34] sm:$0xf]
        %v314 = vld [vmem:[%s252 + $0x38] sm:$0xf]
        %v315 = vld [vmem:[%s252 + $0x3c] sm:$0xf]
        %v316 = vld [vmem:[%s252 + $0x40] sm:$0xf]
        %v317 = vld [vmem:[%s252 + $0x44] sm:$0xf]
        %v318 = vld [vmem:[%s252 + $0x48] sm:$0x3]
        %v351 = vunpack.c.l.b16 %v268
        %v352 = vunpack.c.h.b16 %v268
        %v353 = vunpack.c.l.b16 %v269
        %v354 = vunpack.c.h.b16 %v269
        %v355 = vunpack.c.l.b16 %v270
        %v356 = vunpack.c.h.b16 %v270
        %v357 = vunpack.c.l.b16 %v271
        %v358 = vunpack.c.h.b16 %v271
        %v359 = vunpack.c.l.b16 %v272
        %v360 = vunpack.c.h.b16 %v272
        %v361 = vunpack.c.l.b16 %v273
        %v362 = vunpack.c.h.b16 %v273
        %v363 = vunpack.c.l.b16 %v274
        %v364 = vunpack.c.h.b16 %v274
        %v365 = vunpack.c.l.b16 %v275
        %v366 = vunpack.c.h.b16 %v275
        %v367 = vunpack.c.l.b16 %v276
        %v368 = vunpack.c.h.b16 %v276
        %v369 = vunpack.c.l.b16 %v277
        %v370 = vunpack.c.h.b16 %v277
        %v371 = vunpack.c.l.b16 %v278
        %v372 = vunpack.c.h.b16 %v278
        %v373 = vunpack.c.l.b16 %v279
        %v374 = vunpack.c.h.b16 %v279
        %v375 = vunpack.c.l.b16 %v280
        %v376 = vunpack.c.h.b16 %v280
        %v377 = vunpack.c.l.b16 %v281
        %v378 = vunpack.c.h.b16 %v281
        %v379 = vunpack.c.l.b16 %v282
        %v380 = vunpack.c.h.b16 %v282
        %v381 = vunpack.c.l.b16 %v283
        %v382 = vunpack.c.h.b16 %v283
        %v383 = vunpack.c.l.b16 %v284
        %v384 = vunpack.c.h.b16 %v284
        %v385 = vunpack.c.l.b16 %v285
        %v386 = vunpack.c.h.b16 %v285
        %v387 = vunpack.c.l.b16 %v286
        %v388 = vunpack.c.h.b16 %v286
        %v389 = vunpack.c.l.b16 %v287
        %v390 = vunpack.c.h.b16 %v287
        %v391 = vunpack.c.l.b16 %v288
        %v392 = vunpack.c.h.b16 %v288
        %v393 = vunpack.c.l.b16 %v289
        %v394 = vunpack.c.h.b16 %v289
        %v395 = vunpack.c.l.b16 %v290
        %v396 = vunpack.c.h.b16 %v290
        %v397 = vunpack.c.l.b16 %v291
        %v398 = vunpack.c.h.b16 %v291
        %v399 = vunpack.c.l.b16 %v292
        %v400 = vunpack.c.h.b16 %v292
        %v401 = vunpack.c.l.b16 %v293
        %v402 = vunpack.c.h.b16 %v293
        %v403 = vunpack.c.l.b16 %v294
        %v404 = vunpack.c.h.b16 %v294
        %v405 = vunpack.c.l.b16 %v295
        %v406 = vunpack.c.h.b16 %v295
        %v407 = vunpack.c.l.b16 %v296
        %v408 = vunpack.c.h.b16 %v296
        %v409 = vunpack.c.l.b16 %v297
        %v410 = vunpack.c.h.b16 %v297
        %v411 = vunpack.c.l.b16 %v298
        %v412 = vunpack.c.h.b16 %v298
        %v413 = vunpack.c.l.b16 %v299
        %v414 = vunpack.c.h.b16 %v299
        %v415 = vpack.c.b16 %v353, %v351
        %v416 = vpack.c.b16 %v354, %v352
        %v417 = vpack.c.b16 %v357, %v355
        %v418 = vpack.c.b16 %v358, %v356
        %v419 = vpack.c.b16 %v361, %v359
        %v420 = vpack.c.b16 %v362, %v360
        %v421 = vpack.c.b16 %v365, %v363
        %v422 = vpack.c.b16 %v366, %v364
        %v423 = vpack.c.b16 %v369, %v367
        %v424 = vpack.c.b16 %v370, %v368
        %v425 = vpack.c.b16 %v373, %v371
        %v426 = vpack.c.b16 %v374, %v372
        %v427 = vpack.c.b16 %v377, %v375
        %v428 = vpack.c.b16 %v378, %v376
        %v429 = vpack.c.b16 %v381, %v379
        %v430 = vpack.c.b16 %v382, %v380
        %v431 = vpack.c.b16 %v385, %v383
        %v432 = vpack.c.b16 %v386, %v384
        %v433 = vpack.c.b16 %v389, %v387
        %v434 = vpack.c.b16 %v390, %v388
        %v435 = vpack.c.b16 %v393, %v391
        %v436 = vpack.c.b16 %v394, %v392
        %v437 = vpack.c.b16 %v397, %v395
        %v438 = vpack.c.b16 %v398, %v396
        %v439 = vpack.c.b16 %v401, %v399
        %v440 = vpack.c.b16 %v402, %v400
        %v441 = vpack.c.b16 %v405, %v403
        %v442 = vpack.c.b16 %v406, %v404
        %v443 = vpack.c.b16 %v409, %v407
        %v444 = vpack.c.b16 %v410, %v408
        %v445 = vpack.c.b16 %v413, %v411
        %v446 = vpack.c.b16 %v414, %v412
        %v482 = vunpack.c.l.b16 %v300
        %v483 = vunpack.c.l.b16 %v301
        %v484 = vunpack.c.l.b16 %v302
        %v485 = vunpack.c.l.b16 %v303
        %v486 = vunpack.c.l.b16 %v304
        %v487 = vunpack.c.l.b16 %v305
        %v488 = vunpack.c.l.b16 %v306
        %v489 = vunpack.c.l.b16 %v307
        %v490 = vunpack.c.l.b16 %v308
        %v491 = vunpack.c.l.b16 %v309
        %v492 = vunpack.c.l.b16 %v310
        %v493 = vunpack.c.l.b16 %v311
        %v494 = vunpack.c.l.b16 %v312
        %v495 = vunpack.c.l.b16 %v313
        %v496 = vunpack.c.l.b16 %v314
        %v497 = vunpack.c.l.b16 %v315
        %v498 = vunpack.c.l.b16 %v316
        %v499 = vunpack.c.l.b16 %v317
        %v500 = vunpack.c.l.b16 %v318
        %v501 = vpack.c.b16 %v483, %v482
        %v502 = vpack.c.b16 %v485, %v484
        %v503 = vpack.c.b16 %v487, %v486
        %v504 = vpack.c.b16 %v489, %v488
        %v505 = vpack.c.b16 %v491, %v490
        %v506 = vpack.c.b16 %v493, %v492
        %v507 = vpack.c.b16 %v495, %v494
        %v508 = vpack.c.b16 %v497, %v496
        %v509 = vpack.c.b16 %v499, %v498
        %v510 = vpack.c.b16 %v500, %v500
        %vm520 = vcmask 154624
        %v522 = vsel %vm520, %v416, 0
        %v525 = vsel %vm520, %v418, 0
        %v528 = vsel %vm520, %v420, 0
        %v531 = vsel %vm520, %v422, 0
        %v534 = vsel %vm520, %v424, 0
        %v537 = vsel %vm520, %v426, 0
        %v540 = vsel %vm520, %v428, 0
        %v543 = vsel %vm520, %v430, 0
        %v546 = vsel %vm520, %v432, 0
        %v549 = vsel %vm520, %v434, 0
        %v552 = vsel %vm520, %v436, 0
        %v555 = vsel %vm520, %v438, 0
        %v558 = vsel %vm520, %v440, 0
        %v561 = vsel %vm520, %v442, 0
        %v564 = vsel %vm520, %v444, 0
        %v567 = vsel %vm520, %v446, 0
        %vm569 = vcmask 1040384
        %vm570 = vcmask 1041408
        %v571 = vsel %vm569, 4294967295, 65535
        %v572 = vsel %vm570, %v571, 0
        %v574 = vand.u32 %v510, %v572
        %576 = vmatprep.subr.bf16.mxu0 0
        %577 = vmatpush1.bf16.msra.mxu0 %v501
        %578 = vmatprep.subr.bf16.mxu0 0
        %579 = vmatpush1.bf16.msra.mxu0 %v502
        %580 = vmatprep.subr.bf16.mxu0 0
        %581 = vmatpush1.bf16.msra.mxu0 %v503
        %582 = vmatprep.subr.bf16.mxu0 0
        %583 = vmatpush1.bf16.msra.mxu0 %v504
        %584 = vmatprep.subr.bf16.mxu0 0
        %585 = vmatpush1.bf16.msra.mxu0 %v505
        %586 = vmatprep.subr.bf16.mxu0 0
        %587 = vmatpush1.bf16.msra.mxu0 %v506
        %588 = vmatprep.subr.bf16.mxu0 0
        %589 = vmatpush1.bf16.msra.mxu0 %v507
        %590 = vmatprep.subr.bf16.mxu0 0
        %591 = vmatpush1.bf16.msra.mxu0 %v508
        %592 = vmatprep.subr.bf16.mxu0 0
        %593 = vmatpush1.bf16.msra.mxu0 %v509
        %594 = vmatprep.subr.bf16.mxu0 0
        %595 = vmatpush1.bf16.msra.mxu0 %v574
        %596 = vmatprep.subr.bf16.mxu0 0
        %597 = vmatpush1.bf16.msra.mxu0 0
        %598 = vmatprep.subr.bf16.mxu0 0
        %599 = vmatpush1.bf16.msra.mxu0 0
        %600 = vmatprep.subr.bf16.mxu0 0
        %601 = vmatpush1.bf16.msra.mxu0 0
        %602 = vmatprep.subr.bf16.mxu0 0
        %603 = vmatpush1.bf16.msra.mxu0 0
        %604 = vmatprep.subr.bf16.mxu0 0
        %605 = vmatpush1.bf16.msra.mxu0 0
        %606 = vmatprep.subr.bf16.mxu0 0
        %607 = vmatpush1.bf16.msra.mxu0 0
        %608 = vmatprep.mubr.bf16.mxu0 %v522
        %609 = vmatmul.mubr.bf16.gmra.mrb[0].mxu0 %v415
        %v610 = vpop.f32.mrb[0].mxu0
        %v611 = vadd.f32 0.0, %v610
        %v612 = vpop.f32.mrb[0].mxu0
        %v613 = vpop.f32.mrb[0].mxu0
        %v614 = vadd.f32 0.0, %v613
        %v615 = vpop.f32.mrb[0].mxu0
        %616 = vmatprep.mubr.bf16.mxu0 %v525
        %617 = vmatmul.mubr.bf16.gmra.mrb[0].mxu0 %v417
        %v618 = vpop.f32.mrb[0].mxu0
        %v619 = vadd.f32 0.0, %v618
        %v620 = vpop.f32.mrb[0].mxu0
        %v621 = vpop.f32.mrb[0].mxu0
        %v622 = vadd.f32 0.0, %v621
        %v623 = vpop.f32.mrb[0].mxu0
        %624 = vmatprep.mubr.bf16.mxu0 %v528
        %625 = vmatmul.mubr.bf16.gmra.mrb[0].mxu0 %v419
        %v626 = vpop.f32.mrb[0].mxu0
        %v627 = vadd.f32 0.0, %v626
        %v628 = vpop.f32.mrb[0].mxu0
        %v629 = vpop.f32.mrb[0].mxu0
        %v630 = vadd.f32 0.0, %v629
        %v631 = vpop.f32.mrb[0].mxu0
        %632 = vmatprep.mubr.bf16.mxu0 %v531
        %633 = vmatmul.mubr.bf16.gmra.mrb[0].mxu0 %v421
        %v634 = vpop.f32.mrb[0].mxu0
        %v635 = vadd.f32 0.0, %v634
        %v636 = vpop.f32.mrb[0].mxu0
        %v637 = vpop.f32.mrb[0].mxu0
        %v638 = vadd.f32 0.0, %v637
        %v639 = vpop.f32.mrb[0].mxu0
        %640 = vmatprep.mubr.bf16.mxu0 %v534
        %641 = vmatmul.mubr.bf16.gmra.mrb[0].mxu0 %v423
        %v642 = vpop.f32.mrb[0].mxu0
        %v643 = vadd.f32 0.0, %v642
        %v644 = vpop.f32.mrb[0].mxu0
        %v645 = vpop.f32.mrb[0].mxu0
        %v646 = vadd.f32 0.0, %v645
        %v647 = vpop.f32.mrb[0].mxu0
        %648 = vmatprep.mubr.bf16.mxu0 %v537
        %649 = vmatmul.mubr.bf16.gmra.mrb[0].mxu0 %v425
        %v650 = vpop.f32.mrb[0].mxu0
        %v651 = vadd.f32 0.0, %v650
        %v652 = vpop.f32.mrb[0].mxu0
        %v653 = vpop.f32.mrb[0].mxu0
        %v654 = vadd.f32 0.0, %v653
        %v655 = vpop.f32.mrb[0].mxu0
        %656 = vmatprep.mubr.bf16.mxu0 %v540
        %657 = vmatmul.mubr.bf16.gmra.mrb[0].mxu0 %v427
        %v658 = vpop.f32.mrb[0].mxu0
        %v659 = vadd.f32 0.0, %v658
        %v660 = vpop.f32.mrb[0].mxu0
        %v661 = vpop.f32.mrb[0].mxu0
        %v662 = vadd.f32 0.0, %v661
        %v663 = vpop.f32.mrb[0].mxu0
        %664 = vmatprep.mubr.bf16.mxu0 %v543
        %665 = vmatmul.mubr.bf16.gmra.mrb[0].mxu0 %v429
        %v666 = vpop.f32.mrb[0].mxu0
        %v667 = vadd.f32 0.0, %v666
        %v668 = vpop.f32.mrb[0].mxu0
        %v669 = vpop.f32.mrb[0].mxu0
        %v670 = vadd.f32 0.0, %v669
        %v671 = vpop.f32.mrb[0].mxu0
        %672 = vmatprep.mubr.bf16.mxu0 %v546
        %673 = vmatmul.mubr.bf16.gmra.mrb[0].mxu0 %v431
        %v674 = vpop.f32.mrb[0].mxu0
        %v675 = vadd.f32 0.0, %v674
        %v676 = vpop.f32.mrb[0].mxu0
        %v677 = vpop.f32.mrb[0].mxu0
        %v678 = vadd.f32 0.0, %v677
        %v679 = vpop.f32.mrb[0].mxu0
        %680 = vmatprep.mubr.bf16.mxu0 %v549
        %681 = vmatmul.mubr.bf16.gmra.mrb[0].mxu0 %v433
        %v682 = vpop.f32.mrb[0].mxu0
        %v683 = vadd.f32 0.0, %v682
        %v684 = vpop.f32.mrb[0].mxu0
        %v685 = vpop.f32.mrb[0].mxu0
        %v686 = vadd.f32 0.0, %v685
        %v687 = vpop.f32.mrb[0].mxu0
        %688 = vmatprep.mubr.bf16.mxu0 %v552
        %689 = vmatmul.mubr.bf16.gmra.mrb[0].mxu0 %v435
        %v690 = vpop.f32.mrb[0].mxu0
        %v691 = vadd.f32 0.0, %v690
        %v692 = vpop.f32.mrb[0].mxu0
        %v693 = vpop.f32.mrb[0].mxu0
        %v694 = vadd.f32 0.0, %v693
        %v695 = vpop.f32.mrb[0].mxu0
        %696 = vmatprep.mubr.bf16.mxu0 %v555
        %697 = vmatmul.mubr.bf16.gmra.mrb[0].mxu0 %v437
        %v698 = vpop.f32.mrb[0].mxu0
        %v699 = vadd.f32 0.0, %v698
        %v700 = vpop.f32.mrb[0].mxu0
        %v701 = vpop.f32.mrb[0].mxu0
        %v702 = vadd.f32 0.0, %v701
        %v703 = vpop.f32.mrb[0].mxu0
        %704 = vmatprep.mubr.bf16.mxu0 %v558
        %705 = vmatmul.mubr.bf16.gmra.mrb[0].mxu0 %v439
        %v706 = vpop.f32.mrb[0].mxu0
        %v707 = vadd.f32 0.0, %v706
        %v708 = vpop.f32.mrb[0].mxu0
        %v709 = vpop.f32.mrb[0].mxu0
        %v710 = vadd.f32 0.0, %v709
        %v711 = vpop.f32.mrb[0].mxu0
        %712 = vmatprep.mubr.bf16.mxu0 %v561
        %713 = vmatmul.mubr.bf16.gmra.mrb[0].mxu0 %v441
        %v714 = vpop.f32.mrb[0].mxu0
        %v715 = vadd.f32 0.0, %v714
        %v716 = vpop.f32.mrb[0].mxu0
        %v717 = vpop.f32.mrb[0].mxu0
        %v718 = vadd.f32 0.0, %v717
        %v719 = vpop.f32.mrb[0].mxu0
        %720 = vmatprep.mubr.bf16.mxu0 %v564
        %721 = vmatmul.mubr.bf16.gmra.mrb[0].mxu0 %v443
        %v722 = vpop.f32.mrb[0].mxu0
        %v723 = vadd.f32 0.0, %v722
        %v724 = vpop.f32.mrb[0].mxu0
        %v725 = vpop.f32.mrb[0].mxu0
        %v726 = vadd.f32 0.0, %v725
        %v727 = vpop.f32.mrb[0].mxu0
        %728 = vmatprep.mubr.bf16.mxu0 %v567
        %729 = vmatmul.mubr.bf16.gmra.mrb[0].mxu0 %v445
        %v730 = vpop.f32.mrb[0].mxu0
        %v731 = vadd.f32 0.0, %v730
        %v732 = vpop.f32.mrb[0].mxu0
        %v733 = vpop.f32.mrb[0].mxu0
        %v734 = vadd.f32 0.0, %v733
        %v735 = vpop.f32.mrb[0].mxu0
        %736 = vdwg.mxu0
        %p737 = scmp.eq.s32.totalorder %s28, 0
        // Predicated region
        $region33: #{tpu_custom_call.1} parent=27 // pred_check
          %p738 = pneg %p737
        $region34: #{tpu_custom_call.1} parent=27 // pred_check_branch
          %740 = sbr.rel (%p738) target = $region36
        $region35: #{tpu_custom_call.1} parent=27 // pred_region
          %vm741 = vcmask 58368
          %742 = vst.msk [vmem:[%s247] sm:$0x3] %vm741, 0.0
        $region36: #{tpu_custom_call.1} parent=27 // pred_fallthru
          _
        %vm743 = vcmask 64512
        %v744 = vsel %vm743, %v611, 0.0
        %v745 = vsel %vm743, %v614, 0.0
        %v746 = vadd.f32 %v744, %v745
        %v747 = vsel %vm743, %v619, 0.0
        %v748 = vadd.f32 %v746, %v747
        %v749 = vsel %vm743, %v622, 0.0
        %v750 = vadd.f32 %v748, %v749
        %v751 = vsel %vm743, %v627, 0.0
        %v752 = vadd.f32 %v750, %v751
        %v753 = vsel %vm743, %v630, 0.0
        %v754 = vadd.f32 %v752, %v753
        %v755 = vsel %vm743, %v635, 0.0
        %v756 = vadd.f32 %v754, %v755
        %v757 = vsel %vm743, %v638, 0.0
        %v758 = vadd.f32 %v756, %v757
        %v759 = vsel %vm743, %v643, 0.0
        %v760 = vadd.f32 %v758, %v759
        %v761 = vsel %vm743, %v646, 0.0
        %v762 = vadd.f32 %v760, %v761
        %v763 = vsel %vm743, %v651, 0.0
        %v764 = vadd.f32 %v762, %v763
        %v765 = vsel %vm743, %v654, 0.0
        %v766 = vadd.f32 %v764, %v765
        %v767 = vsel %vm743, %v659, 0.0
        %v768 = vadd.f32 %v766, %v767
        %v769 = vsel %vm743, %v662, 0.0
        %v770 = vadd.f32 %v768, %v769
        %v771 = vsel %vm743, %v667, 0.0
        %v772 = vadd.f32 %v770, %v771
        %v773 = vsel %vm743, %v670, 0.0
        %v774 = vadd.f32 %v772, %v773
        %v775 = vsel %vm743, %v675, 0.0
        %v776 = vadd.f32 %v774, %v775
        %v777 = vsel %vm743, %v678, 0.0
        %v778 = vadd.f32 %v776, %v777
        %v779 = vsel %vm743, %v683, 0.0
        %v780 = vadd.f32 %v778, %v779
        %v781 = vsel %vm743, %v686, 0.0
        %v782 = vadd.f32 %v780, %v781
        %v783 = vsel %vm743, %v691, 0.0
        %v784 = vadd.f32 %v782, %v783
        %v785 = vsel %vm743, %v694, 0.0
        %v786 = vadd.f32 %v784, %v785
        %v787 = vsel %vm743, %v699, 0.0
        %v788 = vadd.f32 %v786, %v787
        %v789 = vsel %vm743, %v702, 0.0
        %v790 = vadd.f32 %v788, %v789
        %v791 = vsel %vm743, %v707, 0.0
        %v792 = vadd.f32 %v790, %v791
        %v793 = vsel %vm743, %v710, 0.0
        %v794 = vadd.f32 %v792, %v793
        %v795 = vsel %vm743, %v715, 0.0
        %v796 = vadd.f32 %v794, %v795
        %v797 = vsel %vm743, %v718, 0.0
        %v798 = vadd.f32 %v796, %v797
        %v799 = vsel %vm743, %v723, 0.0
        %v800 = vadd.f32 %v798, %v799
        %v801 = vsel %vm743, %v726, 0.0
        %v802 = vadd.f32 %v800, %v801
        %v803 = vsel %vm743, %v731, 0.0
        %v804 = vadd.f32 %v802, %v803
        %v805 = vsel %vm743, %v734, 0.0
        %v806 = vadd.f32 %v804, %v805
        %v807 = vrot.slane %v806, 4
        %v808 = vadd.f32 %v806, %v807
        %v809 = vrot.slane %v808, 2
        %v810 = vadd.f32 %v808, %v809
        %v811 = vrot.slane %v810, 1
        %v812 = vadd.f32 %v810, %v811
        %v813 = vmul.f32 %v611, %v611
        %v814 = vmul.f32 %v614, %v614
        %v815 = vmul.f32 %v619, %v619
        %v816 = vmul.f32 %v622, %v622
        %v817 = vmul.f32 %v627, %v627
        %v818 = vmul.f32 %v630, %v630
        %v819 = vmul.f32 %v635, %v635
        %v820 = vmul.f32 %v638, %v638
        %v821 = vmul.f32 %v643, %v643
        %v822 = vmul.f32 %v646, %v646
        %v823 = vmul.f32 %v651, %v651
        %v824 = vmul.f32 %v654, %v654
        %v825 = vmul.f32 %v659, %v659
        %v826 = vmul.f32 %v662, %v662
        %v827 = vmul.f32 %v667, %v667
        %v828 = vmul.f32 %v670, %v670
        %v829 = vmul.f32 %v675, %v675
        %v830 = vmul.f32 %v678, %v678
        %v831 = vmul.f32 %v683, %v683
        %v832 = vmul.f32 %v686, %v686
        %v833 = vmul.f32 %v691, %v691
        %v834 = vmul.f32 %v694, %v694
        %v835 = vmul.f32 %v699, %v699
        %v836 = vmul.f32 %v702, %v702
        %v837 = vmul.f32 %v707, %v707
        %v838 = vmul.f32 %v710, %v710
        %v839 = vmul.f32 %v715, %v715
        %v840 = vmul.f32 %v718, %v718
        %v841 = vmul.f32 %v723, %v723
        %v842 = vmul.f32 %v726, %v726
        %v843 = vmul.f32 %v731, %v731
        %v844 = vmul.f32 %v734, %v734
        %v845 = vsel %vm743, %v813, 0.0
        %v846 = vsel %vm743, %v814, 0.0
        %v847 = vadd.f32 %v845, %v846
        %v848 = vsel %vm743, %v815, 0.0
        %v849 = vadd.f32 %v847, %v848
        %v850 = vsel %vm743, %v816, 0.0
        %v851 = vadd.f32 %v849, %v850
        %v852 = vsel %vm743, %v817, 0.0
        %v853 = vadd.f32 %v851, %v852
        %v854 = vsel %vm743, %v818, 0.0
        %v855 = vadd.f32 %v853, %v854
        %v856 = vsel %vm743, %v819, 0.0
        %v857 = vadd.f32 %v855, %v856
        %v858 = vsel %vm743, %v820, 0.0
        %v859 = vadd.f32 %v857, %v858
        %v860 = vsel %vm743, %v821, 0.0
        %v861 = vadd.f32 %v859, %v860
        %v862 = vsel %vm743, %v822, 0.0
        %v863 = vadd.f32 %v861, %v862
        %v864 = vsel %vm743, %v823, 0.0
        %v865 = vadd.f32 %v863, %v864
        %v866 = vsel %vm743, %v824, 0.0
        %v867 = vadd.f32 %v865, %v866
        %v868 = vsel %vm743, %v825, 0.0
        %v869 = vadd.f32 %v867, %v868
        %v870 = vsel %vm743, %v826, 0.0
        %v871 = vadd.f32 %v869, %v870
        %v872 = vsel %vm743, %v827, 0.0
        %v873 = vadd.f32 %v871, %v872
        %v874 = vsel %vm743, %v828, 0.0
        %v875 = vadd.f32 %v873, %v874
        %v876 = vsel %vm743, %v829, 0.0
        %v877 = vadd.f32 %v875, %v876
        %v878 = vsel %vm743, %v830, 0.0
        %v879 = vadd.f32 %v877, %v878
        %v880 = vsel %vm743, %v831, 0.0
        %v881 = vadd.f32 %v879, %v880
        %v882 = vsel %vm743, %v832, 0.0
        %v883 = vadd.f32 %v881, %v882
        %v884 = vsel %vm743, %v833, 0.0
        %v885 = vadd.f32 %v883, %v884
        %v886 = vsel %vm743, %v834, 0.0
        %v887 = vadd.f32 %v885, %v886
        %v888 = vsel %vm743, %v835, 0.0
        %v889 = vadd.f32 %v887, %v888
        %v890 = vsel %vm743, %v836, 0.0
        %v891 = vadd.f32 %v889, %v890
        %v892 = vsel %vm743, %v837, 0.0
        %v893 = vadd.f32 %v891, %v892
        %v894 = vsel %vm743, %v838, 0.0
        %v895 = vadd.f32 %v893, %v894
        %v896 = vsel %vm743, %v839, 0.0
        %v897 = vadd.f32 %v895, %v896
        %v898 = vsel %vm743, %v840, 0.0
        %v899 = vadd.f32 %v897, %v898
        %v900 = vsel %vm743, %v841, 0.0
        %v901 = vadd.f32 %v899, %v900
        %v902 = vsel %vm743, %v842, 0.0
        %v903 = vadd.f32 %v901, %v902
        %v904 = vsel %vm743, %v843, 0.0
        %v905 = vadd.f32 %v903, %v904
        %v906 = vsel %vm743, %v844, 0.0
        %v907 = vadd.f32 %v905, %v906
        %v908 = vrot.slane %v907, 4
        %v909 = vadd.f32 %v907, %v908
        %v910 = vrot.slane %v909, 2
        %v911 = vadd.f32 %v909, %v910
        %v912 = vrot.slane %v911, 1
        %v913 = vadd.f32 %v911, %v912
        %v914 = vld [vmem:[%s247] sm:$0x3]
        %v915 = vsel %vm569, %v812, %v913
        %v916 = vadd.f32 %v914, %v915
        %vm917 = vcmask 58368
        %918 = vst.msk [vmem:[%s247] sm:$0x3] %vm917, %v916
        %v919 = vpack.c.bf16 %v614, %v611
        %v920 = vpack.c.bf16 %v622, %v619
        %v921 = vpack.c.bf16 %v630, %v627
        %v922 = vpack.c.bf16 %v638, %v635
        %v923 = vpack.c.bf16 %v646, %v643
        %v924 = vpack.c.bf16 %v654, %v651
        %v925 = vpack.c.bf16 %v662, %v659
        %v926 = vpack.c.bf16 %v670, %v667
        %v927 = vpack.c.bf16 %v678, %v675
        %v928 = vpack.c.bf16 %v686, %v683
        %v929 = vpack.c.bf16 %v694, %v691
        %v930 = vpack.c.bf16 %v702, %v699
        %v931 = vpack.c.bf16 %v710, %v707
        %v932 = vpack.c.bf16 %v718, %v715
        %v933 = vpack.c.bf16 %v726, %v723
        %v934 = vpack.c.bf16 %v734, %v731
        %v951 = vunpack.c.l.b16 %v919
        %v952 = vunpack.c.h.b16 %v919
        %v953 = vunpack.c.l.b16 %v920
        %v954 = vunpack.c.h.b16 %v920
        %v955 = vunpack.c.l.b16 %v921
        %v956 = vunpack.c.h.b16 %v921
        %v957 = vunpack.c.l.b16 %v922
        %v958 = vunpack.c.h.b16 %v922
        %v959 = vunpack.c.l.b16 %v923
        %v960 = vunpack.c.h.b16 %v923
        %v961 = vunpack.c.l.b16 %v924
        %v962 = vunpack.c.h.b16 %v924
        %v963 = vunpack.c.l.b16 %v925
        %v964 = vunpack.c.h.b16 %v925
        %v965 = vunpack.c.l.b16 %v926
        %v966 = vunpack.c.h.b16 %v926
        %v967 = vunpack.c.l.b16 %v927
        %v968 = vunpack.c.h.b16 %v927
        %v969 = vunpack.c.l.b16 %v928
        %v970 = vunpack.c.h.b16 %v928
        %v971 = vunpack.c.l.b16 %v929
        %v972 = vunpack.c.h.b16 %v929
        %v973 = vunpack.c.l.b16 %v930
        %v974 = vunpack.c.h.b16 %v930
        %v975 = vunpack.c.l.b16 %v931
        %v976 = vunpack.c.h.b16 %v931
        %v977 = vunpack.c.l.b16 %v932
        %v978 = vunpack.c.h.b16 %v932
        %v979 = vunpack.c.l.b16 %v933
        %v980 = vunpack.c.h.b16 %v933
        %v981 = vunpack.c.l.b16 %v934
        %v982 = vunpack.c.h.b16 %v934
        %v983 = vpack.c.b16 %v951, %v951
        %v984 = vpack.c.b16 %v952, %v952
        %v985 = vpack.c.b16 %v953, %v953
        %v986 = vpack.c.b16 %v954, %v954
        %v987 = vpack.c.b16 %v955, %v955
        %v988 = vpack.c.b16 %v956, %v956
        %v989 = vpack.c.b16 %v957, %v957
        %v990 = vpack.c.b16 %v958, %v958
        %v991 = vpack.c.b16 %v959, %v959
        %v992 = vpack.c.b16 %v960, %v960
        %v993 = vpack.c.b16 %v961, %v961
        %v994 = vpack.c.b16 %v962, %v962
        %v995 = vpack.c.b16 %v963, %v963
        %v996 = vpack.c.b16 %v964, %v964
        %v997 = vpack.c.b16 %v965, %v965
        %v998 = vpack.c.b16 %v966, %v966
        %v999 = vpack.c.b16 %v967, %v967
        %v1000 = vpack.c.b16 %v968, %v968
        %v1001 = vpack.c.b16 %v969, %v969
        %v1002 = vpack.c.b16 %v970, %v970
        %v1003 = vpack.c.b16 %v971, %v971
        %v1004 = vpack.c.b16 %v972, %v972
        %v1005 = vpack.c.b16 %v973, %v973
        %v1006 = vpack.c.b16 %v974, %v974
        %v1007 = vpack.c.b16 %v975, %v975
        %v1008 = vpack.c.b16 %v976, %v976
        %v1009 = vpack.c.b16 %v977, %v977
        %v1010 = vpack.c.b16 %v978, %v978
        %v1011 = vpack.c.b16 %v979, %v979
        %v1012 = vpack.c.b16 %v980, %v980
        %v1013 = vpack.c.b16 %v981, %v981
        %v1014 = vpack.c.b16 %v982, %v982
        %vm1047 = vcmask 60416
        %1048 = vst.msk [vmem:[%s265] sm:$0xf] %vm1047, %v983
        %1049 = vst.msk [vmem:[%s265 + $0x4] sm:$0xf] %vm1047, %v984
        %1050 = vst.msk [vmem:[%s265 + $0x8] sm:$0xf] %vm1047, %v985
        %1051 = vst.msk [vmem:[%s265 + $0xc] sm:$0xf] %vm1047, %v986
        %1052 = vst.msk [vmem:[%s265 + $0x10] sm:$0xf] %vm1047, %v987
        %1053 = vst.msk [vmem:[%s265 + $0x14] sm:$0xf] %vm1047, %v988
        %1054 = vst.msk [vmem:[%s265 + $0x18] sm:$0xf] %vm1047, %v989
        %1055 = vst.msk [vmem:[%s265 + $0x1c] sm:$0xf] %vm1047, %v990
        %1056 = vst.msk [vmem:[%s265 + $0x20] sm:$0xf] %vm1047, %v991
        %1057 = vst.msk [vmem:[%s265 + $0x24] sm:$0xf] %vm1047, %v992
        %1058 = vst.msk [vmem:[%s265 + $0x28] sm:$0xf] %vm1047, %v993
        %1059 = vst.msk [vmem:[%s265 + $0x2c] sm:$0xf] %vm1047, %v994
        %1060 = vst.msk [vmem:[%s265 + $0x30] sm:$0xf] %vm1047, %v995
        %1061 = vst.msk [vmem:[%s265 + $0x34] sm:$0xf] %vm1047, %v996
        %1062 = vst.msk [vmem:[%s265 + $0x38] sm:$0xf] %vm1047, %v997
        %1063 = vst.msk [vmem:[%s265 + $0x3c] sm:$0xf] %vm1047, %v998
        %1064 = vst.msk [vmem:[%s265 + $0x40] sm:$0xf] %vm1047, %v999
        %1065 = vst.msk [vmem:[%s265 + $0x44] sm:$0xf] %vm1047, %v1000
        %1066 = vst.msk [vmem:[%s265 + $0x48] sm:$0xf] %vm1047, %v1001
        %1067 = vst.msk [vmem:[%s265 + $0x4c] sm:$0xf] %vm1047, %v1002
        %1068 = vst.msk [vmem:[%s265 + $0x50] sm:$0xf] %vm1047, %v1003
        %1069 = vst.msk [vmem:[%s265 + $0x54] sm:$0xf] %vm1047, %v1004
        %1070 = vst.msk [vmem:[%s265 + $0x58] sm:$0xf] %vm1047, %v1005
        %1071 = vst.msk [vmem:[%s265 + $0x5c] sm:$0xf] %vm1047, %v1006
        %1072 = vst.msk [vmem:[%s265 + $0x60] sm:$0xf] %vm1047, %v1007
        %1073 = vst.msk [vmem:[%s265 + $0x64] sm:$0xf] %vm1047, %v1008
        %1074 = vst.msk [vmem:[%s265 + $0x68] sm:$0xf] %vm1047, %v1009
        %1075 = vst.msk [vmem:[%s265 + $0x6c] sm:$0xf] %vm1047, %v1010
        %1076 = vst.msk [vmem:[%s265 + $0x70] sm:$0xf] %vm1047, %v1011
        %1077 = vst.msk [vmem:[%s265 + $0x74] sm:$0xf] %vm1047, %v1012
        %1078 = vst.msk [vmem:[%s265 + $0x78] sm:$0xf] %vm1047, %v1013
        %1079 = vst.msk [vmem:[%s265 + $0x7c] sm:$0xf] %vm1047, %v1014
        %s1080 = smul.u32 16, %s28
        %p1081 = scmp.lt.s32.totalorder %s26, 1
        %s1082 = scalar_select %p1081, %s26, 1
        %p1083 = scmp.lt.s32.totalorder %s1080, 15
        %s1084 = scalar_select %p1083, %s1080, 15
        %p1085 = scmp.lt.s32.totalorder %s27, 0
        %s1086 = scalar_select %p1085, %s27, 0
        %s1087 = smul.addr %s1084, 2
        %s1088 = sadd.s32 %s1086, %s1087
        %s1089 = smul.addr %s1082, 32
        %s1090 = sadd.s32 %s1088, %s1089
        %s1091 = smul.addr %s1090, 4
        %s1092 = scalar_lea.vmem %s2, %s1091
        %s1093 = sand.u32 %s134, 1
        %s1094 = scalar_lea.sflag [#allocation4], %s1093
        %s1095 = sand.u32 %s134, 1
        %s1096 = smul.addr %s1095, 2
        %s1097 = scalar_lea.vmem [#allocation5], %s1096
        // Predicated region
        $region37: #{tpu_custom_call.1} parent=27 // pred_check
          %p1098 = pneg %p116
        $region38: #{tpu_custom_call.1} parent=27 // pred_check_branch
          %1100 = sbr.rel (%p1098) target = $region40
        $region39: #{tpu_custom_call.1} parent=27 // pred_region
          %s1101 = smul.u32 16, %s28
        $region40: #{tpu_custom_call.1} parent=27 // pred_fallthru
          _
        // Predicated region
        $region41: #{tpu_custom_call.1} parent=27 // pred_check
          %p1102 = pneg %p144
        $region42: #{tpu_custom_call.1} parent=27 // pred_check_branch
          %1104 = sbr.rel (%p1102) target = $region44
        $region43: #{tpu_custom_call.1} parent=27 // pred_region
          %s1106 = ssub.s32 32, 32
          %1107 = vsyncadd %s1094, %s1106
          %s1108 = sadd.s32 %s27, %s26
          %s1109 = smul.addr %s1108, 32
          %s1110 = scalar_lea.hbm %s3, %s1109
          %s1112 = sshll.u32 %s1097, 4
          %s1113 = int_to_ptr.vmem [resolvable:$true] %s1112
          %1115 = dma.vmem_to_hbm [thread:$0]  %s1113, 32, %s1110, %s1094
        $region44: #{tpu_custom_call.1} parent=27 // pred_fallthru
          _
      $region28: #{tpu_custom_call.1} parent=5 // pred_fallthru
        _
      %p1116 = scmp.le.s32.totalorder 2, %s16
      // Predicated region
      $region45: #{tpu_custom_call.1} parent=5 // pred_check
        %p1117 = pneg %p1116
      $region46: #{tpu_custom_call.1} parent=5 // pred_check_branch
        %1119 = sbr.rel (%p1117) target = $region48
      $region47: #{tpu_custom_call.1} parent=5 // pred_region
        %s1120 = ssub.s32 %s16, 2
        // Predicated region
        $region49: #{tpu_custom_call.1} parent=47 // pred_check
          %p1121 = pneg %p122
        $region50: #{tpu_custom_call.1} parent=47 // pred_check_branch
          %1123 = sbr.rel (%p1121) target = $region52
        $region51: #{tpu_custom_call.1} parent=47 // pred_region
          %s1124 = smul.u32 16, %s31
          %p1125 = scmp.lt.s32.totalorder %s29, 1
          %s1126 = scalar_select %p1125, %s29, 1
          %p1127 = scmp.lt.s32.totalorder %s1124, 15
          %s1128 = scalar_select %p1127, %s1124, 15
          %p1129 = scmp.lt.s32.totalorder %s30, 0
          %s1130 = scalar_select %p1129, %s30, 0
          %s1131 = smul.addr %s1128, 2
          %s1132 = sadd.s32 %s1130, %s1131
          %s1133 = smul.addr %s1126, 32
          %s1134 = sadd.s32 %s1132, %s1133
          %s1135 = smul.addr %s1134, 4
          %s1136 = scalar_lea.vmem %s2, %s1135
        $region52: #{tpu_custom_call.1} parent=47 // pred_fallthru
          _
        // Predicated region
        $region53: #{tpu_custom_call.1} parent=47 // pred_check
          %p1137 = pneg %p150
        $region54: #{tpu_custom_call.1} parent=47 // pred_check_branch
          %1139 = sbr.rel (%p1137) target = $region56
        $region55: #{tpu_custom_call.1} parent=47 // pred_region
          %s1140 = sand.u32 %s135, 1
          %s1141 = scalar_lea.sflag [#allocation4], %s1140
          %s1142 = sand.u32 %s135, 1
          %s1143 = smul.addr %s1142, 2
          %s1144 = scalar_lea.vmem [#allocation5], %s1143
          %1145 = dma.done %s1141, 32
        $region56: #{tpu_custom_call.1} parent=47 // pred_fallthru
          _
      $region48: #{tpu_custom_call.1} parent=5 // pred_fallthru
        _
    $region6: #{tpu_custom_call.1} parent=1 // loop_footer
      %s20 = sadd.s32 1, %s16
    $region7: #{tpu_custom_call.1} parent=1 // loop_footer_branch
      %15 = sbr.rel target = $region3
    $region8: #{tpu_custom_call.1} parent=1 // loop_exit
      _
    %1146 = vsyncpa [#allocation3], 1
    %s1147 = scalar_lea.sflag [#allocation3], 1
    %1148 = vsyncpa %s1147, 1
    %1149 = vsyncpa [#allocation4], 1
    %s1150 = scalar_lea.sflag [#allocation4], 1
    %1151 = vsyncpa %s1150, 1

</llo_original>
